<compile_context>
chip_gen: v7x
topology: tpu7x:2x2x1
jax: 0.10.0
libtpu: 0.0.40
codegen_flags: <defaults>
</compile_context>

<pallas_src>
import math

import jax
import jax.numpy as jnp
from jax.experimental import pallas as pl
from jax.experimental.pallas import tpu as pltpu


def _copy_kernel(x_ref, o_ref):
    # Straight VMEM tile copy (the op is 100% DMA-bound; no compute to do).
    o_ref[...] = x_ref[...]


def _choose_view2d(squeezed_shape):
    """Pick a lane-dense (rows, lanes) factorization of the squeezed tensor."""
    total = math.prod(squeezed_shape)
    for lanes in (1024, 512, 256, 128):
        if total % lanes == 0:
            return total // lanes, lanes
    # Fallback: keep the original trailing dim as lanes. It may be < 128; the
    # block's last dim then equals the full array dim, which is still legal
    # (just not lane-optimal).
    if len(squeezed_shape) == 1:
        return 1, squeezed_shape[0]
    return total // squeezed_shape[-1], squeezed_shape[-1]


def _choose_tile_rows(rows, lanes, itemsize, target_bytes=2 * 1024 * 1024):
    """Row-tile so one block is ~target_bytes and (8,128)-aligned.

    2 MiB/block * (in + out) * double-buffering = 8 MiB in flight, safe on
    every generation (v5e's 16 MiB scoped VMEM default included).
    """
    tile_r = max(8, target_bytes // (lanes * itemsize))
    tile_r = (tile_r // 8) * 8            # multiple of 8 -> sublane aligned
    if rows <= tile_r:
        return rows                        # full-extent block (always legal)
    return tile_r                          # ragged last block handled by Pallas


def _squeeze_impl(x: jax.Array) -> jax.Array:
    """Equivalent of torch.squeeze(x): drop every dim of size 1."""
    squeezed_shape = tuple(d for d in x.shape if d != 1)

    if len(squeezed_shape) == 0:
        # TODO(synk): all-size-1 input -> 0-d output; no TPU-tileable hot path,
        # handled as a pure (free) reshape.
        return jnp.reshape(x, ())

    rows, lanes = _choose_view2d(squeezed_shape)
    itemsize = jnp.dtype(x.dtype).itemsize
    tile_r = _choose_tile_rows(rows, lanes, itemsize)
    grid = (pl.cdiv(rows, tile_r),)

    # Row-major squeeze preserves element order, so this reshape is free glue.
    x2d = jnp.reshape(x, (rows, lanes))

    out2d = pl.pallas_call(
        _copy_kernel,
        out_shape=jax.ShapeDtypeStruct((rows, lanes), x.dtype),
        grid=grid,
        in_specs=[pl.BlockSpec((tile_r, lanes), lambda i: (i, 0))],
        out_specs=pl.BlockSpec((tile_r, lanes), lambda i: (i, 0)),
        # Pure copy: let XLA alias the output onto the input buffer and skip
        # the extra HBM allocation + round trip where possible.
        input_output_aliases={0: 0},
        compiler_params=pltpu.CompilerParams(
            dimension_semantics=("parallel",)),
    )(x2d)

    return jnp.reshape(out2d, squeezed_shape)


# Jit the wrapper so the reshape glue fuses around the kernel and the
# input/output aliasing resolves inside one XLA program (no eager donation).
squeeze_pallas = jax.jit(_squeeze_impl)


if __name__ == "__main__":
    key = jax.random.PRNGKey(0)

    # Primary case: size-1 dims interleaved with real dims, lane-dense total.
    x1 = jax.random.normal(key, (2, 1, 4, 16, 128, 1), dtype=jnp.float32)
    y1 = jax.block_until_ready(squeeze_pallas(x1))
    ref1 = jnp.squeeze(x1)
    assert y1.shape == ref1.shape == (2, 4, 16, 128), y1.shape
    assert y1.dtype == x1.dtype
    assert bool(jnp.array_equal(y1, ref1))

    # Multi-tile grid case (rows > tile_r): 4 MiB f32 -> 2 row tiles, pipelined.
    x2 = jax.random.normal(jax.random.PRNGKey(1), (1, 4096, 1, 256),
                           dtype=jnp.float32)
    y2 = jax.block_until_ready(squeeze_pallas(x2))
    ref2 = jnp.squeeze(x2)
    assert y2.shape == ref2.shape == (4096, 256), y2.shape
    assert bool(jnp.array_equal(y2, ref2))

    # Fallback path: total not divisible by 128 (narrow-lane full-array block).
    x3 = jax.random.normal(jax.random.PRNGKey(2), (3, 1, 5), dtype=jnp.float32)
    y3 = jax.block_until_ready(squeeze_pallas(x3))
    assert y3.shape == (3, 5), y3.shape
    assert bool(jnp.array_equal(y3, jnp.squeeze(x3)))

    # All-size-1 input -> 0-d output (pure reshape path).
    x4 = jnp.ones((1, 1, 1), dtype=jnp.float32)
    y4 = jax.block_until_ready(squeeze_pallas(x4))
    assert y4.shape == (), y4.shape

    print("KERNEL_OK")
</pallas_src>

<mosaic_0001>
module attributes {stable_mosaic.version = 11 : i64} {
  func.func @_copy_kernel(%arg0: i32, %arg1: memref<16x1024xf32, #tpu.memory_space<vmem>>, %arg2: memref<16x1024xf32, #tpu.memory_space<vmem>>) attributes {dimension_semantics = [#tpu.dimension_semantics<parallel>], iteration_bounds = array<i64: 1>, scalar_prefetch = 0 : i64, scratch_operands = 0 : i64, tpu.core_type = #tpu.core_type<tc>, window_params = [{transform_indices = @transform_0, window_bounds = array<i64: 16, 1024>}, {transform_indices = @transform_1, window_bounds = array<i64: 16, 1024>}]} {
    %c0 = arith.constant 0 : index
    %c0_0 = arith.constant 0 : index
    %0 = vector.load %arg1[%c0, %c0_0] : memref<16x1024xf32, #tpu.memory_space<vmem>>, vector<16x1024xf32>
    %c0_1 = arith.constant 0 : index
    %c0_2 = arith.constant 0 : index
    %1 = vector.load %arg2[%c0_1, %c0_2] : memref<16x1024xf32, #tpu.memory_space<vmem>>, vector<16x1024xf32>
    tpu.vector_store %arg2[%c0_1, %c0_2], %0 {strides = array<i32>} : memref<16x1024xf32, #tpu.memory_space<vmem>>, vector<16x1024xf32>,
    return
  }
  func.func @transform_0(%arg0: i32) -> (i32, i32) {
    %c0_i32 = arith.constant 0 : i32
    %c0_i32_0 = arith.constant 0 : i32
    return %arg0, %c0_i32 : i32, i32
  }
  func.func @transform_1(%arg0: i32) -> (i32, i32) {
    %c0_i32 = arith.constant 0 : i32
    %c0_i32_0 = arith.constant 0 : i32
    return %arg0, %c0_i32 : i32, i32
  }
}

</mosaic_0001>

<llo_original>
// kernel: _squeeze_impl.1
$region0: #{_squeeze_impl.1}
  #allocation0 [shape = 'u32[]', space=smem, size = 0x4, offset = 0x4, fixed_abs, tag = 'smem constant byte address 0x4 - core index']
  #allocation1 [shape = 'u32[144,128]{1,0:T(1,128)}', space=vmem, size = 0x12000, scoped, tag = 'internal scratch']
  %s0 = inlined_call_operand.vmem [shape: f32[16,1024], index: 0, kind: input, shape index: {}, may-alias: {0,1}]
  %s1 = inlined_call_operand.vmem [shape: f32[16,1024], index: 1, kind: output, shape index: {}, may-alias: {0,1}]
  %s2 = sld [smem:[#allocation0]]
  $region14: #{_squeeze_impl.1} parent=0
    _
  %s4 = ssub.s32 1, %s2
  %s5 = scalar_select 0, %s4, %s2
  // Predicated region
  $region2: #{_squeeze_impl.1} parent=0 // pred_check
    _
  $region3: #{_squeeze_impl.1} parent=0 // pred_check_branch
    %7 = sbr.rel (0) target = $region5
  $region4: #{_squeeze_impl.1} parent=0 // pred_region
    _
  $region5: #{_squeeze_impl.1} parent=0 // pred_fallthru
    _
  %v8 = vld [vmem:[%s0] sm:$0xff]
  %v9 = vld [vmem:[%s0 + $0x8] sm:$0xff]
  %v10 = vld [vmem:[%s0 + $0x10] sm:$0xff]
  %v11 = vld [vmem:[%s0 + $0x18] sm:$0xff]
  %v12 = vld [vmem:[%s0 + $0x20] sm:$0xff]
  %v13 = vld [vmem:[%s0 + $0x28] sm:$0xff]
  %v14 = vld [vmem:[%s0 + $0x30] sm:$0xff]
  %v15 = vld [vmem:[%s0 + $0x38] sm:$0xff]
  %v16 = vld [vmem:[%s0 + $0x40] sm:$0xff]
  %v17 = vld [vmem:[%s0 + $0x48] sm:$0xff]
  %v18 = vld [vmem:[%s0 + $0x50] sm:$0xff]
  %v19 = vld [vmem:[%s0 + $0x58] sm:$0xff]
  %v20 = vld [vmem:[%s0 + $0x60] sm:$0xff]
  %v21 = vld [vmem:[%s0 + $0x68] sm:$0xff]
  %v22 = vld [vmem:[%s0 + $0x70] sm:$0xff]
  %v23 = vld [vmem:[%s0 + $0x78] sm:$0xff]
  %24 = vst [vmem:[%s1] sm:$0xff] %v8
  %25 = vst [vmem:[%s1 + $0x8] sm:$0xff] %v9
  %26 = vst [vmem:[%s1 + $0x10] sm:$0xff] %v10
  %27 = vst [vmem:[%s1 + $0x18] sm:$0xff] %v11
  %28 = vst [vmem:[%s1 + $0x20] sm:$0xff] %v12
  %29 = vst [vmem:[%s1 + $0x28] sm:$0xff] %v13
  %30 = vst [vmem:[%s1 + $0x30] sm:$0xff] %v14
  %31 = vst [vmem:[%s1 + $0x38] sm:$0xff] %v15
  %32 = vst [vmem:[%s1 + $0x40] sm:$0xff] %v16
  %33 = vst [vmem:[%s1 + $0x48] sm:$0xff] %v17
  %34 = vst [vmem:[%s1 + $0x50] sm:$0xff] %v18
  %35 = vst [vmem:[%s1 + $0x58] sm:$0xff] %v19
  %36 = vst [vmem:[%s1 + $0x60] sm:$0xff] %v20
  %37 = vst [vmem:[%s1 + $0x68] sm:$0xff] %v21
  %38 = vst [vmem:[%s1 + $0x70] sm:$0xff] %v22
  %39 = vst [vmem:[%s1 + $0x78] sm:$0xff] %v23
  // Predicated region
  $region6: #{_squeeze_impl.1} parent=0 // pred_check
    _
  $region7: #{_squeeze_impl.1} parent=0 // pred_check_branch
    %41 = sbr.rel (0) target = $region9
  $region8: #{_squeeze_impl.1} parent=0 // pred_region
    _
  $region9: #{_squeeze_impl.1} parent=0 // pred_fallthru
    _
  // Predicated region
  $region10: #{_squeeze_impl.1} parent=0 // pred_check
    _
  $region11: #{_squeeze_impl.1} parent=0 // pred_check_branch
    %43 = sbr.rel (0) target = $region13
  $region12: #{_squeeze_impl.1} parent=0 // pred_region
    _
  $region13: #{_squeeze_impl.1} parent=0 // pred_fallthru
    _

</llo_original>
